<compile_context>
chip_gen: v5e
topology: v5e:2x2
jax: 0.10.0
libtpu: 0.0.40
codegen_flags: <defaults>
</compile_context>

<pallas_src>
import jax
import jax.numpy as jnp
from jax import lax
from jax.experimental import pallas as pl
from jax.experimental.pallas import tpu as pltpu


# ---------------------------------- kernel ----------------------------------
def _sepconv_kernel(x_ref, halo_ref, dww_ref, pww_ref, bias_ref, o_ref):
    # x_ref:    (Bt, Cin, TL)        input tile (NCL layout, L on lanes)
    # halo_ref: (ntiles, Bt, Cin, 2) [left, right] boundary cols for every L-tile
    #                                of this batch block (fetched once per b).
    # dww_ref:  (Cin, 3)             depthwise taps
    # pww_ref:  (Cout, Cin)          pointwise weight
    # bias_ref: (Cout, 1)            fused bias = pww @ dw_bias + pw_bias
    # o_ref:    (Bt, Cout, TL)
    j = pl.program_id(1)
    x = x_ref[...]                                   # (Bt, Cin, TL)
    bt, _, tl = x.shape

    h = halo_ref[j]                                  # (Bt, Cin, 2)
    h_left = h[:, :, 0:1]                            # (Bt, Cin, 1)
    h_right = h[:, :, 1:2]                           # (Bt, Cin, 1)

    # 3-tap stencil along lanes via circular rolls (XLU) + boundary-lane patch.
    lane = lax.broadcasted_iota(jnp.int32, x.shape, 2)
    x_m1 = jnp.where(lane == 0, h_left, pltpu.roll(x, 1, axis=2))           # x[t-1]
    x_p1 = jnp.where(lane == tl - 1, h_right, pltpu.roll(x, tl - 1, axis=2))  # x[t+1]

    w = dww_ref[...]                                 # (Cin, 3)
    dw = (w[:, 0:1][None] * x_m1
          + w[:, 1:2][None] * x
          + w[:, 2:3][None] * x_p1)                  # (Bt, Cin, TL); bias folded later

    pww = pww_ref[...]                               # (Cout, Cin)
    bias = bias_ref[...]                             # (Cout, 1)
    for bi in range(bt):                             # Bt is small & static
        out = jnp.dot(pww, dw[bi], preferred_element_type=jnp.float32) + bias
        o_ref[bi] = out.astype(o_ref.dtype)          # lane-dense (Cout, TL) store


# ---------------------------------- wrapper ----------------------------------
def _choose_tiling(B, Cin, Cout, Lp):
    """Pick (Bt, TL): batch rows and lane-tile per grid step."""
    itemsize = 4
    target = 2 * 1024 * 1024           # aim ~2 MB x-block per grid step
    vmem_cap = 40 * 1024 * 1024        # double-buffered cap (v7x: 64 MiB/TC)

    def pad8(c):
        return -(-c // 8) * 8

    tl_cands = [t for t in range(128, Lp + 1, 128) if Lp % t == 0]
    bt_cands = [b for b in range(1, min(B, 32) + 1) if B % b == 0]

    def footprint(bt, tl):
        ntiles = Lp // tl
        x_blk = bt * pad8(Cin) * tl * itemsize
        o_blk = bt * pad8(Cout) * tl * itemsize
        halo_blk = ntiles * bt * pad8(Cin) * 128 * itemsize
        w_blk = (pad8(Cin) + 2 * pad8(Cout)) * 128 * itemsize
        return 2 * (x_blk + o_blk + halo_blk + w_blk)     # double-buffered

    def score(bt, tl):
        steps = (B // bt) * (Lp // tl)
        xb = bt * Cin * tl * itemsize
        return (footprint(bt, tl) <= vmem_cap,   # must fit VMEM (v7x-safe)
                steps >= 2,                      # keep both v7x cores busy
                -abs(xb - target))               # block size near ~2 MB

    return max(((bt, tl) for bt in bt_cands for tl in tl_cands),
               key=lambda p: score(*p))


def separable_conv1d_pallas(x, dw_w, dw_b, pw_w, pw_b):
    """x: (B, Cin, L) float32 (PyTorch NCL). Returns (B, Cout, L)."""
    B, Cin, L = x.shape
    Cout = pw_w.shape[0]

    # Pad L to a multiple of 128: lane-aligned tiles, unmasked stores. Zero
    # padding keeps positions < L exact (it coincides with conv padding=1).
    Lp = -(-L // 128) * 128
    xp = x if Lp == L else jnp.pad(x, ((0, 0), (0, 0), (0, Lp - L)))

    Bt, TL = _choose_tiling(B, Cin, Cout, Lp)
    ntiles = Lp // TL

    # Weight layouts + fused bias (pointwise absorbs the depthwise bias):
    # pww @ (dw + dwb) + pwb == pww @ dw + (pww @ dwb + pwb).
    dww = dw_w[:, 0, :]                                        # (Cin, 3)
    pww = pw_w[:, :, 0]                                        # (Cout, Cin)
    fused_b = pww @ dw_b.reshape(Cin, 1) + pw_b.reshape(Cout, 1)   # (Cout, 1)

    # Per-tile boundary columns (left/right neighbors); zeros at global edges.
    zcol = jnp.zeros((B, Cin, 1), x.dtype)
    if ntiles > 1:
        left = jnp.concatenate(
            [zcol, xp[:, :, TL - 1::TL][:, :, :ntiles - 1]], axis=2)   # (B,Cin,ntiles)
        right = jnp.concatenate([xp[:, :, TL::TL], zcol], axis=2)      # (B,Cin,ntiles)
    else:
        left, right = zcol, zcol
    halo = jnp.stack([left, right], axis=-1)          # (B, Cin, ntiles, 2)
    halo = jnp.transpose(halo, (2, 0, 1, 3))          # (ntiles, B, Cin, 2)

    out = pl.pallas_call(
        _sepconv_kernel,
        out_shape=jax.ShapeDtypeStruct((B, Cout, Lp), x.dtype),
        grid=(B // Bt, ntiles),
        in_specs=[
            pl.BlockSpec((Bt, Cin, TL), lambda b, j: (b, 0, j)),
            pl.BlockSpec((ntiles, Bt, Cin, 2), lambda b, j: (0, b, 0, 0)),
            pl.BlockSpec((Cin, 3), lambda b, j: (0, 0)),
            pl.BlockSpec((Cout, Cin), lambda b, j: (0, 0)),
            pl.BlockSpec((Cout, 1), lambda b, j: (0, 0)),
        ],
        out_specs=pl.BlockSpec((Bt, Cout, TL), lambda b, j: (b, 0, j)),
        compiler_params=pltpu.CompilerParams(
            dimension_semantics=("parallel", "parallel"),
            vmem_limit_bytes=48 * 1024 * 1024,
        ),
    )(xp, halo, dww, pww, fused_b)

    return out if Lp == L else out[:, :, :L]


# ------------------------- pure-JAX reference (NCL) -------------------------
def separable_conv1d_ref(x, dw_w, dw_b, pw_w, pw_b):
    Cin = x.shape[1]
    y = lax.conv_general_dilated(
        x, dw_w, window_strides=(1,), padding=[(1, 1)],
        dimension_numbers=("NCH", "OIH", "NCH"), feature_group_count=Cin)
    y = y + dw_b[None, :, None]
    y = lax.conv_general_dilated(
        y, pw_w, window_strides=(1,), padding=[(0, 0)],
        dimension_numbers=("NCH", "OIH", "NCH"))
    y = y + pw_b[None, :, None]
    return y


if __name__ == "__main__":
    key = jax.random.PRNGKey(0)
    # Configs exercise: L padding, single tile, multi-tile halo path (ntiles>1),
    # batch-blocked path (Bt>1), and padded multi-tile with output slicing.
    for (B, Cin, Cout, L) in [(2, 4, 8, 16), (2, 4, 8, 256),
                              (1, 4, 8, 256), (4, 4, 8, 128), (1, 4, 8, 300)]:
        k1, k2, k3, k4, k5, key = jax.random.split(key, 6)
        x = jax.random.normal(k1, (B, Cin, L), dtype=jnp.float32)
        dw_w = (0.2 * jax.random.normal(k2, (Cin, 1, 3))).astype(jnp.float32)
        dw_b = (0.1 * jax.random.normal(k3, (Cin,))).astype(jnp.float32)
        pw_w = (0.2 * jax.random.normal(k4, (Cout, Cin, 1))).astype(jnp.float32)
        pw_b = (0.1 * jax.random.normal(k5, (Cout,))).astype(jnp.float32)

        y = separable_conv1d_pallas(x, dw_w, dw_b, pw_w, pw_b)
        y = jax.block_until_ready(y)

        y_ref = separable_conv1d_ref(x, dw_w, dw_b, pw_w, pw_b)
        assert y.shape == (B, Cout, L), y.shape
        err = float(jnp.max(jnp.abs(y - y_ref)))
        assert jnp.allclose(y, y_ref, atol=1e-4, rtol=1e-4), (B, Cin, Cout, L, err)
    print("KERNEL_OK")
</pallas_src>

<mosaic_0001>
module attributes {stable_mosaic.version = 11 : i64} {
  func.func @_sepconv_kernel(%arg0: i32, %arg1: i32, %arg2: memref<1x4x128xf32, #tpu.memory_space<vmem>>, %arg3: memref<1x1x4x2xf32, #tpu.memory_space<vmem>>, %arg4: memref<4x3xf32, #tpu.memory_space<vmem>>, %arg5: memref<8x4xf32, #tpu.memory_space<vmem>>, %arg6: memref<8x1xf32, #tpu.memory_space<vmem>>, %arg7: memref<1x8x128xf32, #tpu.memory_space<vmem>>) attributes {dimension_semantics = [#tpu.dimension_semantics<parallel>, #tpu.dimension_semantics<parallel>], iteration_bounds = array<i64: 2, 1>, scalar_prefetch = 0 : i64, scratch_operands = 0 : i64, tpu.core_type = #tpu.core_type<tc>, window_params = [{transform_indices = @transform_0, window_bounds = array<i64: 1, 4, 128>}, {transform_indices = @transform_1, window_bounds = array<i64: 1, 1, 4, 2>}, {pipeline_mode = #tpu.pipeline_mode<synchronous>, transform_indices = @transform_2, window_bounds = array<i64: 4, 3>}, {pipeline_mode = #tpu.pipeline_mode<synchronous>, transform_indices = @transform_3, window_bounds = array<i64: 8, 4>}, {pipeline_mode = #tpu.pipeline_mode<synchronous>, transform_indices = @transform_4, window_bounds = array<i64: 8, 1>}, {transform_indices = @transform_5, window_bounds = array<i64: 1, 8, 128>}]} {
    %c0 = arith.constant 0 : index
    %c0_0 = arith.constant 0 : index
    %c0_1 = arith.constant 0 : index
    %0 = vector.load %arg2[%c0, %c0_0, %c0_1] : memref<1x4x128xf32, #tpu.memory_space<vmem>>, vector<1x4x128xf32>
    %1 = arith.index_cast %arg1 : i32 to index
    %c0_2 = arith.constant 0 : index
    %c0_3 = arith.constant 0 : index
    %c0_4 = arith.constant 0 : index
    %2 = vector.load %arg3[%1, %c0_2, %c0_3, %c0_4] : memref<1x1x4x2xf32, #tpu.memory_space<vmem>>, vector<1x1x4x2xf32>
    %3 = vector.shape_cast %2 : vector<1x1x4x2xf32> to vector<1x4x2xf32>
    %4 = vector.extract_strided_slice %3 {offsets = [0, 0, 0], sizes = [1, 4, 1], strides = [1, 1, 1]} : vector<1x4x2xf32> to vector<1x4x1xf32>
    %5 = vector.extract_strided_slice %3 {offsets = [0, 0, 1], sizes = [1, 4, 1], strides = [1, 1, 1]} : vector<1x4x2xf32> to vector<1x4x1xf32>
    %6 = tpu.iota {dimensions = array<i32: 2>} : vector<1x4x128xi32>
    %c0_i32 = arith.constant 0 : i32
    %7 = vector.broadcast %c0_i32 : i32 to vector<1x4x128xi32>
    %8 = arith.cmpi eq, %6, %7 : vector<1x4x128xi32>
    %c1_i32 = arith.constant 1 : i32
    %9 = tpu.dynamic_rotate %0 by %c1_i32 dim 2 : vector<1x4x128xf32>, i32 -> vector<1x4x128xf32>
    %10 = vector.shape_cast %4 : vector<1x4x1xf32> to vector<1x4x1xf32>
    %11 = vector.broadcast %10 : vector<1x4x1xf32> to vector<1x4x128xf32>
    %12 = arith.select %8, %11, %9 : vector<1x4x128xi1>, vector<1x4x128xf32>
    %c127_i32 = arith.constant 127 : i32
    %13 = vector.broadcast %c127_i32 : i32 to vector<1x4x128xi32>
    %14 = arith.cmpi eq, %6, %13 : vector<1x4x128xi32>
    %c127_i32_5 = arith.constant 127 : i32
    %15 = tpu.dynamic_rotate %0 by %c127_i32_5 dim 2 : vector<1x4x128xf32>, i32 -> vector<1x4x128xf32>
    %16 = vector.shape_cast %5 : vector<1x4x1xf32> to vector<1x4x1xf32>
    %17 = vector.broadcast %16 : vector<1x4x1xf32> to vector<1x4x128xf32>
    %18 = arith.select %14, %17, %15 : vector<1x4x128xi1>, vector<1x4x128xf32>
    %c0_6 = arith.constant 0 : index
    %c0_7 = arith.constant 0 : index
    %19 = vector.load %arg4[%c0_6, %c0_7] : memref<4x3xf32, #tpu.memory_space<vmem>>, vector<4x3xf32>
    %20 = vector.extract_strided_slice %19 {offsets = [0, 0], sizes = [4, 1], strides = [1, 1]} : vector<4x3xf32> to vector<4x1xf32>
    %21 = vector.shape_cast %20 : vector<4x1xf32> to vector<1x4x1xf32>
    %22 = vector.broadcast %21 : vector<1x4x1xf32> to vector<1x4x128xf32>
    %23 = arith.mulf %22, %12 : vector<1x4x128xf32>
    %24 = vector.extract_strided_slice %19 {offsets = [0, 1], sizes = [4, 1], strides = [1, 1]} : vector<4x3xf32> to vector<4x1xf32>
    %25 = vector.shape_cast %24 : vector<4x1xf32> to vector<1x4x1xf32>
    %26 = vector.broadcast %25 : vector<1x4x1xf32> to vector<1x4x128xf32>
    %27 = arith.mulf %26, %0 : vector<1x4x128xf32>
    %28 = arith.addf %23, %27 : vector<1x4x128xf32>
    %29 = vector.extract_strided_slice %19 {offsets = [0, 2], sizes = [4, 1], strides = [1, 1]} : vector<4x3xf32> to vector<4x1xf32>
    %30 = vector.shape_cast %29 : vector<4x1xf32> to vector<1x4x1xf32>
    %31 = vector.broadcast %30 : vector<1x4x1xf32> to vector<1x4x128xf32>
    %32 = arith.mulf %31, %18 : vector<1x4x128xf32>
    %33 = arith.addf %28, %32 : vector<1x4x128xf32>
    %c0_8 = arith.constant 0 : index
    %c0_9 = arith.constant 0 : index
    %34 = vector.load %arg5[%c0_8, %c0_9] : memref<8x4xf32, #tpu.memory_space<vmem>>, vector<8x4xf32>
    %c0_10 = arith.constant 0 : index
    %c0_11 = arith.constant 0 : index
    %35 = vector.load %arg6[%c0_10, %c0_11] : memref<8x1xf32, #tpu.memory_space<vmem>>, vector<8x1xf32>
    %36 = vector.shape_cast %33 : vector<1x4x128xf32> to vector<4x128xf32>
    %cst = arith.constant dense<0.000000e+00> : vector<8x128xf32>
    %37 = tpu.matmul %34, %36, %cst {dimension_numbers = #tpu.dot_dimension_numbers<[1], [0], [0], [1], [0, 0, 1, 1], [], []>} : vector<8x4xf32>, vector<4x128xf32>, vector<8x128xf32> -> vector<8x128xf32>
    %38 = vector.broadcast %35 : vector<8x1xf32> to vector<8x128xf32>
    %39 = arith.addf %37, %38 : vector<8x128xf32>
    %c0_12 = arith.constant 0 : index
    %c0_13 = arith.constant 0 : index
    %c0_14 = arith.constant 0 : index
    %40 = vector.load %arg7[%c0_12, %c0_13, %c0_14] : memref<1x8x128xf32, #tpu.memory_space<vmem>>, vector<1x8x128xf32>
    %41 = vector.shape_cast %40 : vector<1x8x128xf32> to vector<8x128xf32>
    %42 = vector.shape_cast %39 : vector<8x128xf32> to vector<1x8x128xf32>
    tpu.vector_store %arg7[%c0_12, %c0_13, %c0_14], %42 {strides = array<i32>} : memref<1x8x128xf32, #tpu.memory_space<vmem>>, vector<1x8x128xf32>,
    return
  }
  func.func @transform_0(%arg0: i32, %arg1: i32) -> (i32, i32, i32) {
    %c0_i32 = arith.constant 0 : i32
    %c0_i32_0 = arith.constant 0 : i32
    return %arg0, %c0_i32, %arg1 : i32, i32, i32
  }
  func.func @transform_1(%arg0: i32, %arg1: i32) -> (i32, i32, i32, i32) {
    %c0_i32 = arith.constant 0 : i32
    %c0_i32_0 = arith.constant 0 : i32
    %c0_i32_1 = arith.constant 0 : i32
    %c0_i32_2 = arith.constant 0 : i32
    return %c0_i32, %arg0, %c0_i32_0, %c0_i32_1 : i32, i32, i32, i32
  }
  func.func @transform_2(%arg0: i32, %arg1: i32) -> (i32, i32) {
    %c0_i32 = arith.constant 0 : i32
    %c0_i32_0 = arith.constant 0 : i32
    %c0_i32_1 = arith.constant 0 : i32
    return %c0_i32, %c0_i32_0 : i32, i32
  }
  func.func @transform_3(%arg0: i32, %arg1: i32) -> (i32, i32) {
    %c0_i32 = arith.constant 0 : i32
    %c0_i32_0 = arith.constant 0 : i32
    %c0_i32_1 = arith.constant 0 : i32
    return %c0_i32, %c0_i32_0 : i32, i32
  }
  func.func @transform_4(%arg0: i32, %arg1: i32) -> (i32, i32) {
    %c0_i32 = arith.constant 0 : i32
    %c0_i32_0 = arith.constant 0 : i32
    %c0_i32_1 = arith.constant 0 : i32
    return %c0_i32, %c0_i32_0 : i32, i32
  }
  func.func @transform_5(%arg0: i32, %arg1: i32) -> (i32, i32, i32) {
    %c0_i32 = arith.constant 0 : i32
    %c0_i32_0 = arith.constant 0 : i32
    return %arg0, %c0_i32, %arg1 : i32, i32, i32
  }
}

</mosaic_0001>

<llo_original>
// kernel: tpu_custom_call.1
$region0: #{tpu_custom_call.1}
  #allocation0 [shape = 'u32[]', space=smem, size = 0x4, offset = 0x4, fixed_abs, tag = 'smem constant byte address 0x4 - core index']
  #allocation1 [shape = 'u32[72,128]{1,0:T(1,128)}', space=vmem, size = 0x9000, scoped, tag = 'internal scratch']
  %s0 = inlined_call_operand.vmem [shape: f32[2,4,128], index: 0, kind: input, shape index: {}]
  %s1 = inlined_call_operand.vmem [shape: f32[1,2,4,2], index: 1, kind: input, shape index: {}]
  %s2 = inlined_call_operand.vmem [shape: f32[4,3], index: 2, kind: input, shape index: {}]
  %s3 = inlined_call_operand.vmem [shape: f32[8,4], index: 3, kind: input, shape index: {}]
  %s4 = inlined_call_operand.vmem [shape: f32[8,1], index: 4, kind: input, shape index: {}]
  %s5 = inlined_call_operand.hbm [shape: f32[2,8,128], index: 5, kind: output, shape index: {}]
  %s6 = sld [smem:[#allocation0]]
  $region53: #{tpu_custom_call.1} parent=0
    _
  %s8 = ssub.s32 1, %s6
  %s9 = scalar_select 0, %s8, %s6
  $region1: #{tpu_custom_call.1} parent=0
    #allocation2 [shape = 'u8[8192]{0}', space=vmem, size = 0x2000, scoped, tag = 'output window, operand 0']
    #allocation3 [shape = 's32[2]{0}', space=sflag, size = 0x8, scoped, tag = 'scoped memory for tpu_custom_call.1']
    %10 = vsyncpa [#allocation3], 0
    %s11 = scalar_lea.sflag [#allocation3], 1
    %12 = vsyncpa %s11, 0
    loop: start=0, step=1, limit=4
    $region2: #{tpu_custom_call.1} parent=1 // loop_pre_header
      _
    $region3: #{tpu_custom_call.1} parent=1 // loop_header
      %s14 = sphi 0, %s18
      %p15 = scmp.ge.s32.totalorder %s14, 4
      %s21 = sphi 0, %s33
      %s22 = sphi 0, %s29
      %s23 = sphi 0, %s21
      %s24 = sphi 0, %s22
      %s25 = sphi 0, %s23
      %s26 = sphi 0, %s24
      %s38 = sphi 0, %s40
      %s41 = sphi 0, %s38
      %s42 = sphi 0, %s41
      %s58 = sphi 0, %s42
      %s64 = sphi 0, %s66
      %s67 = sphi 0, %s64
      %s68 = sphi 0, %s67
      %s84 = sphi 0, %s68
      %s88 = sphi 0, %s88
      %s90 = sphi 0, %s88
      %s91 = sphi 0, %s90
      %s105 = sphi 0, %s91
      %s109 = sphi 0, %s109
      %s111 = sphi 0, %s109
      %s112 = sphi 0, %s111
      %s126 = sphi 0, %s112
      %s130 = sphi 0, %s130
      %s132 = sphi 0, %s130
      %s133 = sphi 0, %s132
      %s147 = sphi 0, %s133
      %s155 = sphi 0, %s157
      %s158 = sphi 0, %s155
      %s159 = sphi 0, %s158
      %s175 = sphi 0, %s159
    $region4: #{tpu_custom_call.1} parent=1 // loop_header_branch
      %17 = sbr.rel (%p15) target = $region8
    $region5: #{tpu_custom_call.1} parent=1 // loop_body
      %s19 = ssub.s32 %s14, 1
      %s20 = ssub.s32 %s14, 2
      %s27 = sadd.s32 1, %s22
      %p28 = scmp.ge.s32.totalorder %s27, 1
      %s29 = scalar_select %p28, 0, %s27
      %s30 = sadd.s32 1, %s21
      %s31 = scalar_select %p28, %s30, %s21
      %p32 = scmp.ge.s32.totalorder %s31, 2
      %s33 = scalar_select %p32, 0, %s31
      %s34 = ssub.s32 %s21, %s33
      %s35 = ssub.s32 %s22, %s29
      %s36 = sor.u32 %s34, %s35
      %p37 = scmp.eq.s32.totalorder %s36, 0
      %s39 = sadd.s32 %s38, 1
      %s40 = scalar_select %p37, %s38, %s39
      %p43 = pneg %p37
      %p44 = scmp.eq.s32.totalorder %s14, 1
      %p45 = por %p43, %p44
      %p46 = scmp.ne.s32.totalorder %s38, %s41
      %p47 = scmp.eq.s32.totalorder %s14, 0
      %p48 = por %p46, %p47
      %p49 = scmp.ne.s32.totalorder %s38, %s41
      %p50 = scmp.eq.s32.totalorder %s19, 1
      %p51 = por %p49, %p50
      %p52 = scmp.ne.s32.totalorder %s41, %s42
      %p53 = scmp.eq.s32.totalorder %s19, 0
      %p54 = por %p52, %p53
      %p55 = scmp.ne.s32.totalorder %s41, %s42
      %p56 = scmp.eq.s32.totalorder %s20, 1
      %p57 = por %p55, %p56
      %p59 = scmp.ne.s32.totalorder %s42, %s58
      %p60 = scmp.eq.s32.totalorder %s20, 0
      %p61 = por %p59, %p60
      %s62 = ssub.s32 %s21, %s33
      %p63 = scmp.eq.s32.totalorder %s62, 0
      %s65 = sadd.s32 %s64, 1
      %s66 = scalar_select %p63, %s64, %s65
      %p69 = pneg %p63
      %p70 = scmp.eq.s32.totalorder %s14, 1
      %p71 = por %p69, %p70
      %p72 = scmp.ne.s32.totalorder %s64, %s67
      %p73 = scmp.eq.s32.totalorder %s14, 0
      %p74 = por %p72, %p73
      %p75 = scmp.ne.s32.totalorder %s64, %s67
      %p76 = scmp.eq.s32.totalorder %s19, 1
      %p77 = por %p75, %p76
      %p78 = scmp.ne.s32.totalorder %s67, %s68
      %p79 = scmp.eq.s32.totalorder %s19, 0
      %p80 = por %p78, %p79
      %p81 = scmp.ne.s32.totalorder %s67, %s68
      %p82 = scmp.eq.s32.totalorder %s20, 1
      %p83 = por %p81, %p82
      %p85 = scmp.ne.s32.totalorder %s68, %s84
      %p86 = scmp.eq.s32.totalorder %s20, 0
      %p87 = por %p85, %p86
      %s89 = sadd.s32 %s88, 1
      %p92 = scmp.eq.s32.totalorder %s14, 1
      %p93 = scmp.ne.s32.totalorder %s88, %s90
      %p94 = scmp.eq.s32.totalorder %s14, 0
      %p95 = por %p93, %p94
      %p96 = scmp.ne.s32.totalorder %s88, %s90
      %p97 = scmp.eq.s32.totalorder %s19, 1
      %p98 = por %p96, %p97
      %p99 = scmp.ne.s32.totalorder %s90, %s91
      %p100 = scmp.eq.s32.totalorder %s19, 0
      %p101 = por %p99, %p100
      %p102 = scmp.ne.s32.totalorder %s90, %s91
      %p103 = scmp.eq.s32.totalorder %s20, 1
      %p104 = por %p102, %p103
      %p106 = scmp.ne.s32.totalorder %s91, %s105
      %p107 = scmp.eq.s32.totalorder %s20, 0
      %p108 = por %p106, %p107
      %s110 = sadd.s32 %s109, 1
      %p113 = scmp.eq.s32.totalorder %s14, 1
      %p114 = scmp.ne.s32.totalorder %s109, %s111
      %p115 = scmp.eq.s32.totalorder %s14, 0
      %p116 = por %p114, %p115
      %p117 = scmp.ne.s32.totalorder %s109, %s111
      %p118 = scmp.eq.s32.totalorder %s19, 1
      %p119 = por %p117, %p118
      %p120 = scmp.ne.s32.totalorder %s111, %s112
      %p121 = scmp.eq.s32.totalorder %s19, 0
      %p122 = por %p120, %p121
      %p123 = scmp.ne.s32.totalorder %s111, %s112
      %p124 = scmp.eq.s32.totalorder %s20, 1
      %p125 = por %p123, %p124
      %p127 = scmp.ne.s32.totalorder %s112, %s126
      %p128 = scmp.eq.s32.totalorder %s20, 0
      %p129 = por %p127, %p128
      %s131 = sadd.s32 %s130, 1
      %p134 = scmp.eq.s32.totalorder %s14, 1
      %p135 = scmp.ne.s32.totalorder %s130, %s132
      %p136 = scmp.eq.s32.totalorder %s14, 0
      %p137 = por %p135, %p136
      %p138 = scmp.ne.s32.totalorder %s130, %s132
      %p139 = scmp.eq.s32.totalorder %s19, 1
      %p140 = por %p138, %p139
      %p141 = scmp.ne.s32.totalorder %s132, %s133
      %p142 = scmp.eq.s32.totalorder %s19, 0
      %p143 = por %p141, %p142
      %p144 = scmp.ne.s32.totalorder %s132, %s133
      %p145 = scmp.eq.s32.totalorder %s20, 1
      %p146 = por %p144, %p145
      %p148 = scmp.ne.s32.totalorder %s133, %s147
      %p149 = scmp.eq.s32.totalorder %s20, 0
      %p150 = por %p148, %p149
      %s151 = ssub.s32 %s21, %s33
      %s152 = ssub.s32 %s22, %s29
      %s153 = sor.u32 %s151, %s152
      %p154 = scmp.eq.s32.totalorder %s153, 0
      %s156 = sadd.s32 %s155, 1
      %s157 = scalar_select %p154, %s155, %s156
      %p160 = pneg %p154
      %p161 = scmp.eq.s32.totalorder %s14, 1
      %p162 = por %p160, %p161
      %p163 = scmp.ne.s32.totalorder %s155, %s158
      %p164 = scmp.eq.s32.totalorder %s14, 0
      %p165 = por %p163, %p164
      %p166 = scmp.ne.s32.totalorder %s155, %s158
      %p167 = scmp.eq.s32.totalorder %s19, 1
      %p168 = por %p166, %p167
      %p169 = scmp.ne.s32.totalorder %s158, %s159
      %p170 = scmp.eq.s32.totalorder %s19, 0
      %p171 = por %p169, %p170
      %p172 = scmp.ne.s32.totalorder %s158, %s159
      %p173 = scmp.eq.s32.totalorder %s20, 1
      %p174 = por %p172, %p173
      %p176 = scmp.ne.s32.totalorder %s159, %s175
      %p177 = scmp.eq.s32.totalorder %s20, 0
      %p178 = por %p176, %p177
      %p179 = scmp.le.s32.totalorder 1, %s14
      %p180 = scmp.lt.s32.totalorder %s14, 3
      %p181 = pnand %p179, %p180
      %p182 = pneg %p181
      // Predicated region
      $region9: #{tpu_custom_call.1} parent=5 // pred_check
        _
      $region10: #{tpu_custom_call.1} parent=5 // pred_check_branch
        %184 = sbr.rel (%p181) target = $region12
      $region11: #{tpu_custom_call.1} parent=5 // pred_region
        %s185 = ssub.s32 %s14, 1
        // Predicated region
        $region13: #{tpu_custom_call.1} parent=11 // pred_check
          %p186 = pneg %p101
        $region14: #{tpu_custom_call.1} parent=11 // pred_check_branch
          %188 = sbr.rel (%p186) target = $region16
        $region15: #{tpu_custom_call.1} parent=11 // pred_region
          _
        $region16: #{tpu_custom_call.1} parent=11 // pred_fallthru
          _
        // Predicated region
        $region17: #{tpu_custom_call.1} parent=11 // pred_check
          %p189 = pneg %p122
        $region18: #{tpu_custom_call.1} parent=11 // pred_check_branch
          %191 = sbr.rel (%p189) target = $region20
        $region19: #{tpu_custom_call.1} parent=11 // pred_region
          _
        $region20: #{tpu_custom_call.1} parent=11 // pred_fallthru
          _
        // Predicated region
        $region21: #{tpu_custom_call.1} parent=11 // pred_check
          %p192 = pneg %p143
        $region22: #{tpu_custom_call.1} parent=11 // pred_check_branch
          %194 = sbr.rel (%p192) target = $region24
        $region23: #{tpu_custom_call.1} parent=11 // pred_region
          _
        $region24: #{tpu_custom_call.1} parent=11 // pred_fallthru
          _
      $region12: #{tpu_custom_call.1} parent=5 // pred_fallthru
        _
      %p195 = scmp.lt.s32.totalorder %s14, 2
      // Predicated region
      $region25: #{tpu_custom_call.1} parent=5 // pred_check
        %p196 = pneg %p195
      $region26: #{tpu_custom_call.1} parent=5 // pred_check_branch
        %198 = sbr.rel (%p196) target = $region28
      $region27: #{tpu_custom_call.1} parent=5 // pred_region
        // Predicated region
        $region29: #{tpu_custom_call.1} parent=27 // pred_check
          %p199 = pneg %p48
        $region30: #{tpu_custom_call.1} parent=27 // pred_check_branch
          %201 = sbr.rel (%p199) target = $region32
        $region31: #{tpu_custom_call.1} parent=27 // pred_region
          %p202 = scmp.lt.s32.totalorder %s21, 1
          %s203 = scalar_select %p202, %s21, 1
          %p204 = scmp.lt.s32.totalorder %s22, 0
          %s205 = scalar_select %p204, %s22, 0
          %s206 = sadd.s32 %s205, %s203
          %s207 = smul.addr %s206, 4
          %s208 = scalar_lea.vmem %s0, %s207
        $region32: #{tpu_custom_call.1} parent=27 // pred_fallthru
          _
        // Predicated region
        $region33: #{tpu_custom_call.1} parent=27 // pred_check
          %p209 = pneg %p74
        $region34: #{tpu_custom_call.1} parent=27 // pred_check_branch
          %211 = sbr.rel (%p209) target = $region36
        $region35: #{tpu_custom_call.1} parent=27 // pred_region
          %p212 = scmp.lt.s32.totalorder %s21, 1
          %s213 = scalar_select %p212, %s21, 1
          %s214 = smul.addr %s213, 4
          %s215 = scalar_lea.vmem %s1, %s214
        $region36: #{tpu_custom_call.1} parent=27 // pred_fallthru
          _
      $region28: #{tpu_custom_call.1} parent=5 // pred_fallthru
        _
      %p216 = scmp.le.s32.totalorder 1, %s14
      %p217 = scmp.lt.s32.totalorder %s14, 3
      %p218 = pnand %p216, %p217
      %p219 = pneg %p218
      // Predicated region
      $region37: #{tpu_custom_call.1} parent=5 // pred_check
        _
      $region38: #{tpu_custom_call.1} parent=5 // pred_check_branch
        %221 = sbr.rel (%p218) target = $region40
      $region39: #{tpu_custom_call.1} parent=5 // pred_region
        %s222 = ssub.s32 %s14, 1
        %p223 = scmp.lt.s32.totalorder %s23, 1
        %s224 = scalar_select %p223, %s23, 1
        %p225 = scmp.lt.s32.totalorder %s24, 0
        %s226 = scalar_select %p225, %s24, 0
        %s227 = sadd.s32 %s226, %s224
        %s228 = smul.addr %s227, 4
        %s229 = scalar_lea.vmem %s0, %s228
        %p230 = pneg %p54
        %p231 = pneg %p51
        %p232 = scmp.lt.s32.totalorder %s23, 1
        %s233 = scalar_select %p232, %s23, 1
        %s234 = smul.addr %s233, 4
        %s235 = scalar_lea.vmem %s1, %s234
        %p236 = pneg %p80
        %p237 = pneg %p77
        %p238 = pneg %p101
        %p239 = pneg %p98
        %p240 = pneg %p122
        %p241 = pneg %p119
        %p242 = pneg %p143
        %p243 = pneg %p140
        %p244 = pneg %p171
        %p245 = pneg %p168
        %s246 = sand.u32 %s158, 1
        %s247 = scalar_lea.sflag [#allocation3], %s246
        %s248 = sand.u32 %s158, 1
        %s249 = smul.addr %s248, 8
        %s250 = scalar_lea.vmem [#allocation2], %s249
        %p251 = scmp.lt.s32.totalorder %s23, 1
        %s252 = scalar_select %p251, %s23, 1
        %p253 = scmp.lt.s32.totalorder %s24, 0
        %s254 = scalar_select %p253, %s24, 0
        %s255 = sadd.s32 %s254, %s252
        %s256 = smul.addr %s255, 4
        %s257 = scalar_lea.vmem %s0, %s256
        %p258 = scmp.lt.s32.totalorder %s23, 1
        %s259 = scalar_select %p258, %s23, 1
        %s260 = smul.addr %s259, 4
        %s261 = scalar_lea.vmem %s1, %s260
        %v262 = vld [vmem:[%s257] sm:$0xf]
        %s263 = smul.u32 %s24, 4
        %s264 = scalar_lea.vmem %s261, %s263
        %v265 = vld [vmem:[%s264] sm:$0xf]
        %v266 = vlaneseq
        %v267 = vand.u32 %v266, 127
        %vm268 = vcmp.eq.s32.totalorder %v267, 0
        %269 = vrot.lane.b32.xlu0 %v262, 1
        %v270 = vpop.permute.xlu0 %269
        %272 = vset.pattern.permute.xlu0 0
        %273 = vperm.xlu0 %272, %v265
        %v274 = vpop.permute.xlu0 %273
        %v276 = vsel %vm268, %v274, %v270
        %vm277 = vcmp.eq.s32.totalorder %v267, 127
        %278 = vrot.lane.b32.xlu0 %v262, 127
        %v279 = vpop.permute.xlu0 %278
        %280 = vset.pattern.permute.xlu0 1
        %281 = vperm.xlu0 %280, %v265
        %v282 = vpop.permute.xlu0 %281
        %v284 = vsel %vm277, %v282, %v279
        %v285 = vld [vmem:[%s2] sm:$0xf]
        %287 = vset.pattern.permute.xlu0 0
        %288 = vperm.xlu0 %287, %v285
        %v289 = vpop.permute.xlu0 %288
        %v291 = vmul.f32 %v289, %v276
        %292 = vset.pattern.permute.xlu0 1
        %293 = vperm.xlu0 %292, %v285
        %v294 = vpop.permute.xlu0 %293
        %v296 = vmul.f32 %v294, %v262
        %v297 = vadd.f32 %v291, %v296
        %298 = vset.pattern.permute.xlu0 2
        %299 = vperm.xlu0 %298, %v285
        %v300 = vpop.permute.xlu0 %299
        %v302 = vmul.f32 %v300, %v284
        %v303 = vadd.f32 %v297, %v302
        %v304 = vld [vmem:[%s3] sm:$0xff]
        %v305 = vld [vmem:[%s4] sm:$0xff]
        %307 = vset.pattern.permute.xlu0 0
        %308 = vperm.xlu0 %307, %v305
        %v309 = vpop.permute.xlu0 %308
        %vm311 = vcmask 31744
        %v313 = vsel %vm311, %v304, 0
        %vm315 = vcmask 1043456
        %v317 = vsel %vm315, %v303, 0
        %319 = vmatpush.msra.mxu0 0.0
        %320 = vmatpush.msra.mxu0 0.0
        %321 = vmatpush.msra.mxu0 0.0
        %322 = vmatpush.msra.mxu0 0.0
        %323 = vmatpush.msra.mxu0 0.0
        %324 = vmatpush.msra.mxu0 0.0
        %325 = vmatpush.msra.mxu0 0.0
        %326 = vmatpush.msra.mxu0 0.0
        %327 = vmatpush.msra.mxu0 0.0
        %328 = vmatpush.msra.mxu0 0.0
        %329 = vmatpush.msra.mxu0 0.0
        %330 = vmatpush.msra.mxu0 0.0
        %331 = vmatpush.msra.mxu0 0.0
        %332 = vmatpush.msra.mxu0 0.0
        %333 = vmatpush.msra.mxu0 0.0
        %334 = vmatpush.msra.mxu0 %v317
        %335 = vmatmul.f32.gmra.mxu0 %v313
        %v336 = vpop.f32.mrf.mxu0
        %v337 = vadd.f32 %v309, %v336
        %338 = vdwg.mxu0
        %339 = vst [vmem:[%s250] sm:$0xff] %v337
        %s340 = sand.u32 %s158, 1
        %s341 = scalar_lea.sflag [#allocation3], %s340
        %s342 = sand.u32 %s158, 1
        %s343 = smul.addr %s342, 8
        %s344 = scalar_lea.vmem [#allocation2], %s343
        // Predicated region
        $region41: #{tpu_custom_call.1} parent=39 // pred_check
          %p345 = pneg %p168
        $region42: #{tpu_custom_call.1} parent=39 // pred_check_branch
          %347 = sbr.rel (%p345) target = $region44
        $region43: #{tpu_custom_call.1} parent=39 // pred_region
          %349 = vsyncadd %s341, 0
          %s350 = sadd.s32 %s24, %s23
          %s351 = smul.addr %s350, 8
          %s352 = scalar_lea.hbm %s5, %s351
          %s354 = sshll.u32 %s344, 4
          %s355 = int_to_ptr.vmem [resolvable:$true] %s354
          %s356 = sshll.u32 %s352, 4
          %s357 = int_to_ptr.hbm [resolvable:$true] %s356
          %359 = dma.vmem_to_hbm [thread:$0]  %s355, 128, %s357, %s341
        $region44: #{tpu_custom_call.1} parent=39 // pred_fallthru
          _
      $region40: #{tpu_custom_call.1} parent=5 // pred_fallthru
        _
      %p360 = scmp.le.s32.totalorder 2, %s14
      // Predicated region
      $region45: #{tpu_custom_call.1} parent=5 // pred_check
        %p361 = pneg %p360
      $region46: #{tpu_custom_call.1} parent=5 // pred_check_branch
        %363 = sbr.rel (%p361) target = $region48
      $region47: #{tpu_custom_call.1} parent=5 // pred_region
        %s364 = ssub.s32 %s14, 2
        // Predicated region
        $region49: #{tpu_custom_call.1} parent=47 // pred_check
          %p365 = pneg %p174
        $region50: #{tpu_custom_call.1} parent=47 // pred_check_branch
          %367 = sbr.rel (%p365) target = $region52
        $region51: #{tpu_custom_call.1} parent=47 // pred_region
          %s368 = sand.u32 %s159, 1
          %s369 = scalar_lea.sflag [#allocation3], %s368
          %s370 = sand.u32 %s159, 1
          %s371 = smul.addr %s370, 8
          %s372 = scalar_lea.vmem [#allocation2], %s371
          %374 = dma.done %s369, 128
        $region52: #{tpu_custom_call.1} parent=47 // pred_fallthru
          _
      $region48: #{tpu_custom_call.1} parent=5 // pred_fallthru
        _
    $region6: #{tpu_custom_call.1} parent=1 // loop_footer
      %s18 = sadd.s32 1, %s14
    $region7: #{tpu_custom_call.1} parent=1 // loop_footer_branch
      %13 = sbr.rel target = $region3
    $region8: #{tpu_custom_call.1} parent=1 // loop_exit
      _
    %375 = vsyncpa [#allocation3], 1
    %s376 = scalar_lea.sflag [#allocation3], 1
    %377 = vsyncpa %s376, 1

</llo_original>
